<compile_context>
chip_gen: v7x
topology: tpu7x:2x2x1
jax: 0.10.0
libtpu: 0.0.40
codegen_flags: <defaults>
</compile_context>

<pallas_src>
import functools
import math

import jax
import jax.numpy as jnp
import numpy as np
from jax.experimental import pallas as pl
from jax.experimental.pallas import tpu as pltpu


def _round_up(x, m):
    return ((x + m - 1) // m) * m


# ----------------------------- Pallas kernels ------------------------------ #
def _sspt_kernel_resident(x_ref, w_ref, bias_ref, o_ref, *, inv_n):
    # x_ref    : (TM, PDp)   token tile (bf16), PDp = padded patch_dim
    # w_ref    : (PDp, DIMp) full (LN-folded) weight, resident across the grid
    # bias_ref : (1, DIMp)   folded bias (f32)
    # o_ref    : (TM, DIMp)  output tile (bf16)
    x = x_ref[...].astype(jnp.float32)
    s1 = jnp.sum(x, axis=-1, keepdims=True)
    s2 = jnp.sum(x * x, axis=-1, keepdims=True)
    mean = s1 * inv_n
    var = jnp.maximum(s2 * inv_n - mean * mean, 0.0)   # guard cancellation
    rstd = jax.lax.rsqrt(var + 1e-5)
    xn = ((x - mean) * rstd).astype(w_ref.dtype)       # bf16 early
    y = jnp.dot(xn, w_ref[...], preferred_element_type=jnp.float32)
    y = y + bias_ref[...].astype(jnp.float32)
    o_ref[...] = y.astype(o_ref.dtype)


def _sspt_kernel_tiled(x_ref, w_ref, bias_ref, o_ref, xn_ref, *, inv_n):
    # 2-D grid (i tokens "parallel", j columns "arbitrary", j innermost).
    # LayerNorm is hoisted: computed once per token tile into xn_ref scratch.
    @pl.when(pl.program_id(1) == 0)
    def _():
        x = x_ref[...].astype(jnp.float32)
        s1 = jnp.sum(x, axis=-1, keepdims=True)
        s2 = jnp.sum(x * x, axis=-1, keepdims=True)
        mean = s1 * inv_n
        var = jnp.maximum(s2 * inv_n - mean * mean, 0.0)
        rstd = jax.lax.rsqrt(var + 1e-5)
        xn_ref[...] = ((x - mean) * rstd).astype(xn_ref.dtype)

    y = jnp.dot(xn_ref[...], w_ref[...], preferred_element_type=jnp.float32)
    y = y + bias_ref[...].astype(jnp.float32)
    o_ref[...] = y.astype(o_ref.dtype)


def _choose_plan(tokens, pd_p, dim_p, itemsize=2):
    """Pick (tm, tn, resident, vmem_need) under a conservative VMEM budget."""
    w_bytes = pd_p * dim_p * itemsize
    resident = w_bytes <= (12 << 20)            # whole weight resident in VMEM
    if resident:
        tn = dim_p
    else:
        tn = 256 if dim_p % 256 == 0 else 128

    def need(tm):
        return (2 * tm * pd_p * itemsize              # x tiles (double-buffer)
                + 2 * pd_p * tn * itemsize            # weight buffers
                + 2 * tm * tn * itemsize              # output tiles (bf16)
                + 3 * tm * pd_p * 4                   # f32 LN temporaries
                + (0 if resident else tm * pd_p * itemsize)  # xn scratch
                + 2 * dim_p * 4)                      # bias

    budget = 40 << 20                           # conservative for v7x 64 MiB/TC
    tokens_cap = _round_up(tokens, 16)
    tm_sel = 16
    for tm in (512, 256, 128, 64, 32, 16):      # multiples of 16 (bf16 packing)
        if tm > tokens_cap:
            continue
        if tokens > 16 and pl.cdiv(tokens, tm) < 2:
            continue                            # >=2 parallel tiles (megacore)
        if need(tm) <= budget:
            tm_sel = tm
            break
    return tm_sel, tn, resident, need(tm_sel)


def sspt_tokens_pallas(patches, weight, bias, *, patch_dim_real):
    """patches: (tokens, pd_p); weight: (pd_p, dim_p); bias: (1, dim_p).

    Returns (tokens, dim_p) in the weight's compute dtype (bf16)."""
    tokens, pd_p = patches.shape
    dim_p = weight.shape[1]
    assert pd_p % 128 == 0 and dim_p % 128 == 0

    tm, tn, resident, vmem_need = _choose_plan(tokens, pd_p, dim_p,
                                               weight.dtype.itemsize)
    inv_n = 1.0 / float(patch_dim_real)
    grid_i = pl.cdiv(tokens, tm)

    if resident:
        kernel = functools.partial(_sspt_kernel_resident, inv_n=inv_n)
        grid = (grid_i,)
        in_specs = [
            pl.BlockSpec((tm, pd_p), lambda i: (i, 0)),
            pl.BlockSpec((pd_p, dim_p), lambda i: (0, 0)),   # resident weight
            pl.BlockSpec((1, dim_p), lambda i: (0, 0)),
        ]
        out_specs = pl.BlockSpec((tm, dim_p), lambda i: (i, 0))
        scratch_shapes = []
        dim_sem = ("parallel",)
        weight_passes = 1
    else:
        kernel = functools.partial(_sspt_kernel_tiled, inv_n=inv_n)
        grid = (grid_i, dim_p // tn)
        in_specs = [
            pl.BlockSpec((tm, pd_p), lambda i, j: (i, 0)),
            pl.BlockSpec((pd_p, tn), lambda i, j: (0, j)),
            pl.BlockSpec((1, tn), lambda i, j: (0, j)),
        ]
        out_specs = pl.BlockSpec((tm, tn), lambda i, j: (i, j))
        scratch_shapes = [pltpu.VMEM((tm, pd_p), weight.dtype)]
        dim_sem = ("parallel", "arbitrary")
        weight_passes = grid_i

    itemsize = patches.dtype.itemsize
    flops = 2 * tokens * pd_p * dim_p
    bytes_accessed = (tokens * pd_p * itemsize
                      + weight_passes * pd_p * dim_p * weight.dtype.itemsize
                      + tokens * dim_p * 2
                      + dim_p * 4)
    vmem_limit = int(min(44 << 20, max(vmem_need + (4 << 20), 16 << 20)))

    return pl.pallas_call(
        kernel,
        out_shape=jax.ShapeDtypeStruct((tokens, dim_p), weight.dtype),
        grid_spec=pltpu.PrefetchScalarGridSpec(
            num_scalar_prefetch=0,
            grid=grid,
            in_specs=in_specs,
            out_specs=out_specs,
            scratch_shapes=scratch_shapes),
        compiler_params=pltpu.CompilerParams(
            dimension_semantics=dim_sem,
            vmem_limit_bytes=vmem_limit),
        cost_estimate=pl.CostEstimate(flops=flops, transcendentals=tokens,
                                      bytes_accessed=bytes_accessed),
    )(patches, weight, bias)


# ------------------------------- JAX glue ---------------------------------- #
# NHWC shifts (W axis = 2, H axis = 1), matching F.pad semantics on NCHW:
def _shift_right_w(t):   # F.pad(x, (1, -1, 0, 0))
    return jnp.pad(t, ((0, 0), (0, 0), (1, 0), (0, 0)))[:, :, :-1, :]


def _shift_left_w(t):    # F.pad(x, (-1, 1, 0, 0))
    return jnp.pad(t, ((0, 0), (0, 0), (0, 1), (0, 0)))[:, :, 1:, :]


def _shift_down_h(t):    # F.pad(x, (0, 0, 1, -1))
    return jnp.pad(t, ((0, 0), (1, 0), (0, 0), (0, 0)))[:, :-1, :, :]


def _shift_up_h(t):      # F.pad(x, (0, 0, -1, 1))
    return jnp.pad(t, ((0, 0), (0, 1), (0, 0), (0, 0)))[:, 1:, :, :]


def sspt_forward(x, params, *, patch_size, compute_dtype=jnp.bfloat16):
    """x: (B, C, H, W) NCHW, matching the PyTorch module.  Returns bf16."""
    B, C, H, W = x.shape
    p = patch_size
    assert H % p == 0 and W % p == 0
    hp, wp = H // p, W // p
    pp = p * p
    c5 = 5 * C
    patch_dim = pp * c5
    dim = params["lin_w_t"].shape[1]
    tokens = B * hp * wp

    # Lane-friendly padded sizes.  patch_dim padding is realised by padding
    # the channel axis (c5 -> c5_pad), so pd_p = pp * c5_pad is a multiple of
    # 128 and the zero columns are interleaved per-(p1,p2) group.
    lcm = pp * 128 // math.gcd(pp, 128)
    pd_p = _round_up(patch_dim, lcm)
    c5_pad = pd_p // pp
    dim_p = _round_up(dim, 128)

    # --- NHWC-first 5-way shift + concat (+ fused channel padding) --------- #
    xh = jnp.transpose(x, (0, 2, 3, 1)).astype(compute_dtype)   # (B, H, W, C)
    parts = [xh, _shift_right_w(xh), _shift_left_w(xh),
             _shift_down_h(xh), _shift_up_h(xh)]
    if c5_pad > c5:
        parts.append(jnp.zeros((B, H, W, c5_pad - c5), compute_dtype))
    x5 = jnp.concatenate(parts, axis=-1)                         # (B,H,W,c5p)
    # 'b (h p1) (w p2) c -> (b h w) (p1 p2 c)'  — contiguous c5_pad inner run.
    x5 = x5.reshape(B, hp, p, wp, p, c5_pad)
    x5 = jnp.transpose(x5, (0, 1, 3, 2, 4, 5))                   # b,h,w,p1,p2,c
    patches = x5.reshape(tokens, pd_p)                           # (tokens, pd_p)

    # --- Fold LayerNorm affine into the linear layer (f32), then pad ------- #
    w_t = params["lin_w_t"].astype(jnp.float32)                  # (patch_dim, dim)
    gamma = params["ln_gamma"].astype(jnp.float32)
    beta = params["ln_beta"].astype(jnp.float32)
    bias = params["lin_b"].astype(jnp.float32)
    w_fold = gamma[:, None] * w_t
    bias_fold = beta @ w_t + bias
    # Reorder rows to the (p1 p2 c_padded) layout; pad rows are exactly zero,
    # which is what keeps the interleaved pad columns of `patches` inert.
    w_fold = w_fold.reshape(pp, c5, dim)
    w_fold = jnp.pad(w_fold, ((0, 0), (0, c5_pad - c5), (0, 0)))
    w_fold = w_fold.reshape(pd_p, dim)
    w_fold = jnp.pad(w_fold, ((0, 0), (0, dim_p - dim))).astype(compute_dtype)
    bias_fold = jnp.pad(bias_fold, (0, dim_p - dim))[None, :]    # (1, dim_p) f32

    out = sspt_tokens_pallas(patches, w_fold, bias_fold,
                             patch_dim_real=patch_dim)
    out = out[:, :dim]                                           # drop col pad
    return out.reshape(B, hp * wp, dim)                          # (B, N, dim)


def sspt_reference(x, params, *, patch_size):
    """Pure-JAX f32 reference of the PyTorch forward (NCHW path), unfolded LN."""
    B, C, H, W = x.shape
    p = patch_size

    def sr(t):  # shift right (W)
        return jnp.pad(t, ((0, 0), (0, 0), (0, 0), (1, 0)))[..., :-1]

    def sl(t):  # shift left (W)
        return jnp.pad(t, ((0, 0), (0, 0), (0, 0), (0, 1)))[..., 1:]

    def sd(t):  # shift down (H)
        return jnp.pad(t, ((0, 0), (0, 0), (1, 0), (0, 0)))[..., :-1, :]

    def su(t):  # shift up (H)
        return jnp.pad(t, ((0, 0), (0, 0), (0, 1), (0, 0)))[..., 1:, :]

    x5 = jnp.concatenate([x, sr(x), sl(x), sd(x), su(x)], axis=1)
    c5 = 5 * C
    hp, wp = H // p, W // p
    x5 = x5.reshape(B, c5, hp, p, wp, p)
    x5 = jnp.transpose(x5, (0, 2, 4, 3, 5, 1))          # b, h, w, p1, p2, c
    patches = x5.reshape(B, hp * wp, p * p * c5).astype(jnp.float32)

    mean = jnp.mean(patches, axis=-1, keepdims=True)
    var = jnp.mean((patches - mean) ** 2, axis=-1, keepdims=True)
    xn = (patches - mean) / jnp.sqrt(var + 1e-5)
    xn = xn * params["ln_gamma"] + params["ln_beta"]
    return xn @ params["lin_w_t"] + params["lin_b"]


# --------------------------------- main ------------------------------------ #
if __name__ == "__main__":
    B, C, H, W = 2, 4, 16, 16
    patch_size = 4
    dim = 32
    patch_dim = patch_size * patch_size * 5 * C  # 320

    key = jax.random.PRNGKey(0)
    kx, kw, kb, kg, kbe = jax.random.split(key, 5)

    x = jax.random.normal(kx, (B, C, H, W), dtype=jnp.float32)

    # Non-trivial LN affine so the gamma/beta fold is actually exercised.
    params = {
        "ln_gamma": 1.0 + 0.1 * jax.random.normal(kg, (patch_dim,), jnp.float32),
        "ln_beta": 0.05 * jax.random.normal(kbe, (patch_dim,), jnp.float32),
        # PyTorch Linear weight is (dim, patch_dim); store transposed for x @ W.
        "lin_w_t": (jax.random.normal(kw, (patch_dim, dim), jnp.float32)
                    * (1.0 / np.sqrt(patch_dim))),
        "lin_b": jax.random.normal(kb, (dim,), jnp.float32) * 0.01,
    }

    fwd = jax.jit(functools.partial(sspt_forward, patch_size=patch_size))
    out = fwd(x, params)
    jax.block_until_ready(out)

    ref = sspt_reference(x, params, patch_size=patch_size)
    # bf16 patches/weights/output vs f32 reference -> loose tolerance.
    np.testing.assert_allclose(np.asarray(out.astype(jnp.float32)),
                               np.asarray(ref), rtol=8e-2, atol=8e-2)

    print("KERNEL_OK")
</pallas_src>

<mosaic_0001>
module attributes {stable_mosaic.version = 11 : i64} {
  func.func @_sspt_kernel_resident(%arg0: i32, %arg1: memref<16x384xbf16, #tpu.memory_space<vmem>>, %arg2: memref<384x128xbf16, #tpu.memory_space<vmem>>, %arg3: memref<1x128xf32, #tpu.memory_space<vmem>>, %arg4: memref<16x128xbf16, #tpu.memory_space<vmem>>) attributes {dimension_semantics = [#tpu.dimension_semantics<parallel>], iteration_bounds = array<i64: 2>, scalar_prefetch = 0 : i64, scratch_operands = 0 : i64, tpu.core_type = #tpu.core_type<tc>, window_params = [{transform_indices = @transform_0, window_bounds = array<i64: 16, 384>}, {pipeline_mode = #tpu.pipeline_mode<synchronous>, transform_indices = @transform_1, window_bounds = array<i64: 384, 128>}, {pipeline_mode = #tpu.pipeline_mode<synchronous>, transform_indices = @transform_2, window_bounds = array<i64: 1, 128>}, {transform_indices = @transform_3, window_bounds = array<i64: 16, 128>}]} {
    %c0 = arith.constant 0 : index
    %c0_0 = arith.constant 0 : index
    %0 = vector.load %arg1[%c0, %c0_0] : memref<16x384xbf16, #tpu.memory_space<vmem>>, vector<16x384xbf16>
    %1 = arith.extf %0 : vector<16x384xbf16> to vector<16x384xf32>
    %cst = arith.constant dense<0.000000e+00> : vector<16xf32>
    %2 = vector.multi_reduction <add>, %1, %cst [1] : vector<16x384xf32> to vector<16xf32>
    %3 = vector.shape_cast %2 : vector<16xf32> to vector<16x1xf32>
    %4 = arith.mulf %1, %1 : vector<16x384xf32>
    %cst_1 = arith.constant dense<0.000000e+00> : vector<16xf32>
    %5 = vector.multi_reduction <add>, %4, %cst_1 [1] : vector<16x384xf32> to vector<16xf32>
    %6 = vector.shape_cast %5 : vector<16xf32> to vector<16x1xf32>
    %cst_2 = arith.constant 3.125000e-03 : f32
    %7 = vector.broadcast %cst_2 : f32 to vector<16x1xf32>
    %8 = arith.mulf %3, %7 : vector<16x1xf32>
    %cst_3 = arith.constant 3.125000e-03 : f32
    %9 = vector.broadcast %cst_3 : f32 to vector<16x1xf32>
    %10 = arith.mulf %6, %9 : vector<16x1xf32>
    %11 = arith.mulf %8, %8 : vector<16x1xf32>
    %12 = arith.subf %10, %11 : vector<16x1xf32>
    %cst_4 = arith.constant 0.000000e+00 : f32
    %13 = vector.broadcast %cst_4 : f32 to vector<16x1xf32>
    %14 = arith.maximumf %12, %13 : vector<16x1xf32>
    %cst_5 = arith.constant 9.99999974E-6 : f32
    %15 = vector.broadcast %cst_5 : f32 to vector<16x1xf32>
    %16 = arith.addf %14, %15 : vector<16x1xf32>
    %17 = math.rsqrt %16 : vector<16x1xf32>
    %18 = vector.broadcast %8 : vector<16x1xf32> to vector<16x384xf32>
    %19 = arith.subf %1, %18 : vector<16x384xf32>
    %20 = vector.broadcast %17 : vector<16x1xf32> to vector<16x384xf32>
    %21 = arith.mulf %19, %20 : vector<16x384xf32>
    %22 = arith.truncf %21 : vector<16x384xf32> to vector<16x384xbf16>
    %c0_6 = arith.constant 0 : index
    %c0_7 = arith.constant 0 : index
    %23 = vector.load %arg2[%c0_6, %c0_7] : memref<384x128xbf16, #tpu.memory_space<vmem>>, vector<384x128xbf16>
    %cst_8 = arith.constant dense<0.000000e+00> : vector<16x128xf32>
    %24 = tpu.matmul %22, %23, %cst_8 {dimension_numbers = #tpu.dot_dimension_numbers<[1], [0], [0], [1], [0, 0, 1, 1], [], []>} : vector<16x384xbf16>, vector<384x128xbf16>, vector<16x128xf32> -> vector<16x128xf32>
    %c0_9 = arith.constant 0 : index
    %c0_10 = arith.constant 0 : index
    %25 = vector.load %arg3[%c0_9, %c0_10] : memref<1x128xf32, #tpu.memory_space<vmem>>, vector<1x128xf32>
    %26 = vector.broadcast %25 : vector<1x128xf32> to vector<16x128xf32>
    %27 = arith.addf %24, %26 : vector<16x128xf32>
    %28 = arith.truncf %27 : vector<16x128xf32> to vector<16x128xbf16>
    %c0_11 = arith.constant 0 : index
    %c0_12 = arith.constant 0 : index
    %29 = vector.load %arg4[%c0_11, %c0_12] : memref<16x128xbf16, #tpu.memory_space<vmem>>, vector<16x128xbf16>
    tpu.vector_store %arg4[%c0_11, %c0_12], %28 {strides = array<i32>} : memref<16x128xbf16, #tpu.memory_space<vmem>>, vector<16x128xbf16>,
    return
  }
  func.func @transform_0(%arg0: i32) -> (i32, i32) {
    %c0_i32 = arith.constant 0 : i32
    %c0_i32_0 = arith.constant 0 : i32
    return %arg0, %c0_i32 : i32, i32
  }
  func.func @transform_1(%arg0: i32) -> (i32, i32) {
    %c0_i32 = arith.constant 0 : i32
    %c0_i32_0 = arith.constant 0 : i32
    %c0_i32_1 = arith.constant 0 : i32
    return %c0_i32, %c0_i32_0 : i32, i32
  }
  func.func @transform_2(%arg0: i32) -> (i32, i32) {
    %c0_i32 = arith.constant 0 : i32
    %c0_i32_0 = arith.constant 0 : i32
    %c0_i32_1 = arith.constant 0 : i32
    return %c0_i32, %c0_i32_0 : i32, i32
  }
  func.func @transform_3(%arg0: i32) -> (i32, i32) {
    %c0_i32 = arith.constant 0 : i32
    %c0_i32_0 = arith.constant 0 : i32
    return %arg0, %c0_i32 : i32, i32
  }
}

</mosaic_0001>

<llo_original>
// kernel: sspt_forward.1
$region0: #{sspt_forward.1}
  #allocation0 [shape = 'u32[]', space=smem, size = 0x4, offset = 0x4, fixed_abs, tag = 'smem constant byte address 0x4 - core index']
  #allocation1 [shape = 'u32[144,128]{1,0:T(1,128)}', space=vmem, size = 0x12000, scoped, tag = 'internal scratch']
  %s0 = inlined_call_operand.vmem [shape: bf16[32,384], index: 0, kind: input, shape index: {}]
  %s1 = inlined_call_operand.vmem [shape: bf16[384,128], index: 1, kind: input, shape index: {}]
  %s2 = inlined_call_operand.vmem [shape: f32[1,128], index: 2, kind: input, shape index: {}]
  %s3 = inlined_call_operand.hbm [shape: bf16[32,128], index: 3, kind: output, shape index: {}]
  %s4 = sld [smem:[#allocation0]]
  $region45: #{sspt_forward.1} parent=0
    _
  %s6 = ssub.s32 1, %s4
  %s7 = scalar_select 0, %s6, %s4
  $region1: #{sspt_forward.1} parent=0
    #allocation2 [shape = 'u8[8192]{0}', space=vmem, size = 0x2000, scoped, tag = 'output window, operand 0']
    #allocation3 [shape = 's32[2]{0}', space=sflag, size = 0x8, scoped, tag = 'scoped memory for sspt_forward.1']
    %8 = vsyncpa [#allocation3], 0
    %s9 = scalar_lea.sflag [#allocation3], 1
    %10 = vsyncpa %s9, 0
    loop: start=0, step=1, limit=4
    $region2: #{sspt_forward.1} parent=1 // loop_pre_header
      _
    $region3: #{sspt_forward.1} parent=1 // loop_header
      %s12 = sphi 0, %s16
      %p13 = scmp.ge.s32.totalorder %s12, 4
      %s22 = sphi 0, %s24
      %s25 = sphi 0, %s22
      %s26 = sphi 0, %s25
      %s42 = sphi 0, %s26
      %s46 = sphi 0, %s46
      %s48 = sphi 0, %s46
      %s49 = sphi 0, %s48
      %s63 = sphi 0, %s49
      %s67 = sphi 0, %s67
      %s69 = sphi 0, %s67
      %s70 = sphi 0, %s69
      %s84 = sphi 0, %s70
      %s90 = sphi 0, %s92
      %s93 = sphi 0, %s90
      %s94 = sphi 0, %s93
      %s110 = sphi 0, %s94
    $region4: #{sspt_forward.1} parent=1 // loop_header_branch
      %15 = sbr.rel (%p13) target = $region8
    $region5: #{sspt_forward.1} parent=1 // loop_body
      %s17 = ssub.s32 %s12, 1
      %s18 = ssub.s32 %s12, 2
      %s19 = sadd.s32 %s12, 1
      %s20 = ssub.s32 %s12, %s19
      %p21 = scmp.eq.s32.totalorder %s20, 0
      %s23 = sadd.s32 %s22, 1
      %s24 = scalar_select %p21, %s22, %s23
      %p27 = pneg %p21
      %p28 = scmp.eq.s32.totalorder %s12, 1
      %p29 = por %p27, %p28
      %p30 = scmp.ne.s32.totalorder %s22, %s25
      %p31 = scmp.eq.s32.totalorder %s12, 0
      %p32 = por %p30, %p31
      %p33 = scmp.ne.s32.totalorder %s22, %s25
      %p34 = scmp.eq.s32.totalorder %s17, 1
      %p35 = por %p33, %p34
      %p36 = scmp.ne.s32.totalorder %s25, %s26
      %p37 = scmp.eq.s32.totalorder %s17, 0
      %p38 = por %p36, %p37
      %p39 = scmp.ne.s32.totalorder %s25, %s26
      %p40 = scmp.eq.s32.totalorder %s18, 1
      %p41 = por %p39, %p40
      %p43 = scmp.ne.s32.totalorder %s26, %s42
      %p44 = scmp.eq.s32.totalorder %s18, 0
      %p45 = por %p43, %p44
      %s47 = sadd.s32 %s46, 1
      %p50 = scmp.eq.s32.totalorder %s12, 1
      %p51 = scmp.ne.s32.totalorder %s46, %s48
      %p52 = scmp.eq.s32.totalorder %s12, 0
      %p53 = por %p51, %p52
      %p54 = scmp.ne.s32.totalorder %s46, %s48
      %p55 = scmp.eq.s32.totalorder %s17, 1
      %p56 = por %p54, %p55
      %p57 = scmp.ne.s32.totalorder %s48, %s49
      %p58 = scmp.eq.s32.totalorder %s17, 0
      %p59 = por %p57, %p58
      %p60 = scmp.ne.s32.totalorder %s48, %s49
      %p61 = scmp.eq.s32.totalorder %s18, 1
      %p62 = por %p60, %p61
      %p64 = scmp.ne.s32.totalorder %s49, %s63
      %p65 = scmp.eq.s32.totalorder %s18, 0
      %p66 = por %p64, %p65
      %s68 = sadd.s32 %s67, 1
      %p71 = scmp.eq.s32.totalorder %s12, 1
      %p72 = scmp.ne.s32.totalorder %s67, %s69
      %p73 = scmp.eq.s32.totalorder %s12, 0
      %p74 = por %p72, %p73
      %p75 = scmp.ne.s32.totalorder %s67, %s69
      %p76 = scmp.eq.s32.totalorder %s17, 1
      %p77 = por %p75, %p76
      %p78 = scmp.ne.s32.totalorder %s69, %s70
      %p79 = scmp.eq.s32.totalorder %s17, 0
      %p80 = por %p78, %p79
      %p81 = scmp.ne.s32.totalorder %s69, %s70
      %p82 = scmp.eq.s32.totalorder %s18, 1
      %p83 = por %p81, %p82
      %p85 = scmp.ne.s32.totalorder %s70, %s84
      %p86 = scmp.eq.s32.totalorder %s18, 0
      %p87 = por %p85, %p86
      %s88 = ssub.s32 %s12, %s19
      %p89 = scmp.eq.s32.totalorder %s88, 0
      %s91 = sadd.s32 %s90, 1
      %s92 = scalar_select %p89, %s90, %s91
      %p95 = pneg %p89
      %p96 = scmp.eq.s32.totalorder %s12, 1
      %p97 = por %p95, %p96
      %p98 = scmp.ne.s32.totalorder %s90, %s93
      %p99 = scmp.eq.s32.totalorder %s12, 0
      %p100 = por %p98, %p99
      %p101 = scmp.ne.s32.totalorder %s90, %s93
      %p102 = scmp.eq.s32.totalorder %s17, 1
      %p103 = por %p101, %p102
      %p104 = scmp.ne.s32.totalorder %s93, %s94
      %p105 = scmp.eq.s32.totalorder %s17, 0
      %p106 = por %p104, %p105
      %p107 = scmp.ne.s32.totalorder %s93, %s94
      %p108 = scmp.eq.s32.totalorder %s18, 1
      %p109 = por %p107, %p108
      %p111 = scmp.ne.s32.totalorder %s94, %s110
      %p112 = scmp.eq.s32.totalorder %s18, 0
      %p113 = por %p111, %p112
      %p114 = scmp.le.s32.totalorder 1, %s12
      %p115 = scmp.lt.s32.totalorder %s12, 3
      %p116 = pnand %p114, %p115
      %p117 = pneg %p116
      // Predicated region
      $region9: #{sspt_forward.1} parent=5 // pred_check
        _
      $region10: #{sspt_forward.1} parent=5 // pred_check_branch
        %119 = sbr.rel (%p116) target = $region12
      $region11: #{sspt_forward.1} parent=5 // pred_region
        %s120 = ssub.s32 %s12, 1
        // Predicated region
        $region13: #{sspt_forward.1} parent=11 // pred_check
          %p121 = pneg %p59
        $region14: #{sspt_forward.1} parent=11 // pred_check_branch
          %123 = sbr.rel (%p121) target = $region16
        $region15: #{sspt_forward.1} parent=11 // pred_region
          _
        $region16: #{sspt_forward.1} parent=11 // pred_fallthru
          _
        // Predicated region
        $region17: #{sspt_forward.1} parent=11 // pred_check
          %p124 = pneg %p80
        $region18: #{sspt_forward.1} parent=11 // pred_check_branch
          %126 = sbr.rel (%p124) target = $region20
        $region19: #{sspt_forward.1} parent=11 // pred_region
          _
        $region20: #{sspt_forward.1} parent=11 // pred_fallthru
          _
      $region12: #{sspt_forward.1} parent=5 // pred_fallthru
        _
      %p127 = scmp.lt.s32.totalorder %s12, 2
      // Predicated region
      $region21: #{sspt_forward.1} parent=5 // pred_check
        %p128 = pneg %p127
      $region22: #{sspt_forward.1} parent=5 // pred_check_branch
        %130 = sbr.rel (%p128) target = $region24
      $region23: #{sspt_forward.1} parent=5 // pred_region
        // Predicated region
        $region25: #{sspt_forward.1} parent=23 // pred_check
          %p131 = pneg %p32
        $region26: #{sspt_forward.1} parent=23 // pred_check_branch
          %133 = sbr.rel (%p131) target = $region28
        $region27: #{sspt_forward.1} parent=23 // pred_region
          %s134 = smul.u32 2, %s12
          %p135 = scmp.lt.s32.totalorder %s134, 3
          %s136 = scalar_select %p135, %s134, 3
          %s137 = smul.addr %s136, 3
          %s138 = smul.addr %s137, 4
          %s139 = scalar_lea.vmem %s0, %s138
          %s140 = smul.u32 2, %s12
        $region28: #{sspt_forward.1} parent=23 // pred_fallthru
          _
      $region24: #{sspt_forward.1} parent=5 // pred_fallthru
        _
      %p141 = scmp.le.s32.totalorder 1, %s12
      %p142 = scmp.lt.s32.totalorder %s12, 3
      %p143 = pnand %p141, %p142
      %p144 = pneg %p143
      // Predicated region
      $region29: #{sspt_forward.1} parent=5 // pred_check
        _
      $region30: #{sspt_forward.1} parent=5 // pred_check_branch
        %146 = sbr.rel (%p143) target = $region32
      $region31: #{sspt_forward.1} parent=5 // pred_region
        %s147 = ssub.s32 %s12, 1
        %s148 = smul.u32 2, %s17
        %p149 = scmp.lt.s32.totalorder %s148, 3
        %s150 = scalar_select %p149, %s148, 3
        %s151 = smul.addr %s150, 3
        %s152 = smul.addr %s151, 4
        %s153 = scalar_lea.vmem %s0, %s152
        %p154 = pneg %p38
        %p155 = pneg %p35
        %p156 = pneg %p59
        %p157 = pneg %p56
        %p158 = pneg %p80
        %p159 = pneg %p77
        %p160 = pneg %p106
        %p161 = pneg %p103
        %s162 = sand.u32 %s93, 1
        %s163 = scalar_lea.sflag [#allocation3], %s162
        %s164 = sand.u32 %s93, 1
        %s165 = smul.addr %s164, 8
        %s166 = scalar_lea.vmem [#allocation2], %s165
        %s167 = smul.u32 2, %s17
        %p168 = scmp.lt.s32.totalorder %s167, 3
        %s169 = scalar_select %p168, %s167, 3
        %s170 = smul.addr %s169, 3
        %s171 = smul.addr %s170, 4
        %s172 = scalar_lea.vmem %s0, %s171
        %s173 = smul.u32 2, %s17
        %s174 = smul.u32 2, %s17
        %v176 = vld [vmem:[%s172] sm:$0xff]
        %v177 = vld [vmem:[%s172 + $0x8] sm:$0xf]
        %v178 = vld [vmem:[%s172 + $0xc] sm:$0xff]
        %v179 = vld [vmem:[%s172 + $0x14] sm:$0xf]
        %v180 = vunpack.c.l.bf16 %v176
        %v181 = vunpack.c.h.bf16 %v176
        %v182 = vunpack.c.l.bf16 %v177
        %v183 = vunpack.c.l.bf16 %v178
        %v184 = vunpack.c.h.bf16 %v178
        %v185 = vunpack.c.l.bf16 %v179
        %v186 = vadd.f32 %v180, %v181
        %v187 = vadd.f32 %v186, %v182
        %188 = vadd.xlane.f32.xlu0 %v187
        %v189 = vpop.xlane.xlu0 %188
        %v190 = vadd.f32 %v183, %v184
        %v191 = vadd.f32 %v190, %v185
        %192 = vadd.xlane.f32.xlu0 %v191
        %v193 = vpop.xlane.xlu0 %192
        %v194 = vmul.f32 %v180, %v180
        %v195 = vmul.f32 %v181, %v181
        %v196 = vmul.f32 %v182, %v182
        %v197 = vmul.f32 %v183, %v183
        %v198 = vmul.f32 %v184, %v184
        %v199 = vmul.f32 %v185, %v185
        %v200 = vadd.f32 %v194, %v195
        %v201 = vadd.f32 %v200, %v196
        %202 = vadd.xlane.f32.xlu0 %v201
        %v203 = vpop.xlane.xlu0 %202
        %v204 = vadd.f32 %v197, %v198
        %v205 = vadd.f32 %v204, %v199
        %206 = vadd.xlane.f32.xlu0 %v205
        %v207 = vpop.xlane.xlu0 %206
        %v208 = vmul.f32 %v189, 0.003125
        %v209 = vmul.f32 %v193, 0.003125
        %v210 = vmul.f32 %v203, 0.003125
        %v211 = vmul.f32 %v207, 0.003125
        %v212 = vmul.f32 %v208, %v208
        %v213 = vmul.f32 %v209, %v209
        %v214 = vsub.f32 %v210, %v212
        %v215 = vsub.f32 %v211, %v213
        %v216 = vmax.f32 %v214, 0.0
        %v217 = vmax.f32 %v215, 0.0
        %v218 = vadd.f32 %v216, 1e-05
        %v219 = vadd.f32 %v217, 1e-05
        %v220 = vrsqrt.pop %v218
        %v221 = vrsqrt.pop %v219
        %v222 = vsub.f32 %v180, %v208
        %v223 = vsub.f32 %v181, %v208
        %v224 = vsub.f32 %v182, %v208
        %v225 = vsub.f32 %v183, %v209
        %v226 = vsub.f32 %v184, %v209
        %v227 = vsub.f32 %v185, %v209
        %v228 = vmul.f32 %v222, %v220
        %v229 = vmul.f32 %v223, %v220
        %v230 = vmul.f32 %v224, %v220
        %v231 = vmul.f32 %v225, %v221
        %v232 = vmul.f32 %v226, %v221
        %v233 = vmul.f32 %v227, %v221
        %v234 = vpack.c.bf16 %v231, %v228
        %v235 = vpack.c.bf16 %v232, %v229
        %v236 = vpack.c.bf16 %v233, %v230
        %v237 = vld [vmem:[%s1] sm:$0xf]
        %v238 = vld [vmem:[%s1 + $0x4] sm:$0xf]
        %v239 = vld [vmem:[%s1 + $0x8] sm:$0xf]
        %v240 = vld [vmem:[%s1 + $0xc] sm:$0xf]
        %v241 = vld [vmem:[%s1 + $0x10] sm:$0xf]
        %v242 = vld [vmem:[%s1 + $0x14] sm:$0xf]
        %v243 = vld [vmem:[%s1 + $0x18] sm:$0xf]
        %v244 = vld [vmem:[%s1 + $0x1c] sm:$0xf]
        %v245 = vld [vmem:[%s1 + $0x20] sm:$0xf]
        %v246 = vld [vmem:[%s1 + $0x24] sm:$0xf]
        %v247 = vld [vmem:[%s1 + $0x28] sm:$0xf]
        %v248 = vld [vmem:[%s1 + $0x2c] sm:$0xf]
        %v249 = vld [vmem:[%s1 + $0x30] sm:$0xf]
        %v250 = vld [vmem:[%s1 + $0x34] sm:$0xf]
        %v251 = vld [vmem:[%s1 + $0x38] sm:$0xf]
        %v252 = vld [vmem:[%s1 + $0x3c] sm:$0xf]
        %v253 = vld [vmem:[%s1 + $0x40] sm:$0xf]
        %v254 = vld [vmem:[%s1 + $0x44] sm:$0xf]
        %v255 = vld [vmem:[%s1 + $0x48] sm:$0xf]
        %v256 = vld [vmem:[%s1 + $0x4c] sm:$0xf]
        %v257 = vld [vmem:[%s1 + $0x50] sm:$0xf]
        %v258 = vld [vmem:[%s1 + $0x54] sm:$0xf]
        %v259 = vld [vmem:[%s1 + $0x58] sm:$0xf]
        %v260 = vld [vmem:[%s1 + $0x5c] sm:$0xf]
        %v261 = vld [vmem:[%s1 + $0x60] sm:$0xf]
        %v262 = vld [vmem:[%s1 + $0x64] sm:$0xf]
        %v263 = vld [vmem:[%s1 + $0x68] sm:$0xf]
        %v264 = vld [vmem:[%s1 + $0x6c] sm:$0xf]
        %v265 = vld [vmem:[%s1 + $0x70] sm:$0xf]
        %v266 = vld [vmem:[%s1 + $0x74] sm:$0xf]
        %v267 = vld [vmem:[%s1 + $0x78] sm:$0xf]
        %v268 = vld [vmem:[%s1 + $0x7c] sm:$0xf]
        %v269 = vld [vmem:[%s1 + $0x80] sm:$0xf]
        %v270 = vld [vmem:[%s1 + $0x84] sm:$0xf]
        %v271 = vld [vmem:[%s1 + $0x88] sm:$0xf]
        %v272 = vld [vmem:[%s1 + $0x8c] sm:$0xf]
        %v273 = vld [vmem:[%s1 + $0x90] sm:$0xf]
        %v274 = vld [vmem:[%s1 + $0x94] sm:$0xf]
        %v275 = vld [vmem:[%s1 + $0x98] sm:$0xf]
        %v276 = vld [vmem:[%s1 + $0x9c] sm:$0xf]
        %v277 = vld [vmem:[%s1 + $0xa0] sm:$0xf]
        %v278 = vld [vmem:[%s1 + $0xa4] sm:$0xf]
        %v279 = vld [vmem:[%s1 + $0xa8] sm:$0xf]
        %v280 = vld [vmem:[%s1 + $0xac] sm:$0xf]
        %v281 = vld [vmem:[%s1 + $0xb0] sm:$0xf]
        %v282 = vld [vmem:[%s1 + $0xb4] sm:$0xf]
        %v283 = vld [vmem:[%s1 + $0xb8] sm:$0xf]
        %v284 = vld [vmem:[%s1 + $0xbc] sm:$0xf]
        %v285 = vld [vmem:[%s2] sm:$0x1]
        %v287 = vlaneseq
        %v288 = vshrl.u32 %v287, 7
        %v289 = vsub.s32 0, %v288
        %v290 = vrot.slane %v285, %v289
        %v340 = vunpack.c.l.b16 %v237
        %v341 = vunpack.c.l.b16 %v238
        %v342 = vunpack.c.l.b16 %v239
        %v343 = vunpack.c.l.b16 %v240
        %v344 = vunpack.c.l.b16 %v241
        %v345 = vunpack.c.l.b16 %v242
        %v346 = vunpack.c.l.b16 %v243
        %v347 = vunpack.c.l.b16 %v244
        %v348 = vunpack.c.l.b16 %v245
        %v349 = vunpack.c.l.b16 %v246
        %v350 = vunpack.c.l.b16 %v247
        %v351 = vunpack.c.l.b16 %v248
        %v352 = vunpack.c.l.b16 %v249
        %v353 = vunpack.c.l.b16 %v250
        %v354 = vunpack.c.l.b16 %v251
        %v355 = vunpack.c.l.b16 %v252
        %v356 = vunpack.c.l.b16 %v253
        %v357 = vunpack.c.l.b16 %v254
        %v358 = vunpack.c.l.b16 %v255
        %v359 = vunpack.c.l.b16 %v256
        %v360 = vunpack.c.l.b16 %v257
        %v361 = vunpack.c.l.b16 %v258
        %v362 = vunpack.c.l.b16 %v259
        %v363 = vunpack.c.l.b16 %v260
        %v364 = vunpack.c.l.b16 %v261
        %v365 = vunpack.c.l.b16 %v262
        %v366 = vunpack.c.l.b16 %v263
        %v367 = vunpack.c.l.b16 %v264
        %v368 = vunpack.c.l.b16 %v265
        %v369 = vunpack.c.l.b16 %v266
        %v370 = vunpack.c.l.b16 %v267
        %v371 = vunpack.c.l.b16 %v268
        %v372 = vunpack.c.l.b16 %v269
        %v373 = vunpack.c.l.b16 %v270
        %v374 = vunpack.c.l.b16 %v271
        %v375 = vunpack.c.l.b16 %v272
        %v376 = vunpack.c.l.b16 %v273
        %v377 = vunpack.c.l.b16 %v274
        %v378 = vunpack.c.l.b16 %v275
        %v379 = vunpack.c.l.b16 %v276
        %v380 = vunpack.c.l.b16 %v277
        %v381 = vunpack.c.l.b16 %v278
        %v382 = vunpack.c.l.b16 %v279
        %v383 = vunpack.c.l.b16 %v280
        %v384 = vunpack.c.l.b16 %v281
        %v385 = vunpack.c.l.b16 %v282
        %v386 = vunpack.c.l.b16 %v283
        %v387 = vunpack.c.l.b16 %v284
        %v388 = vpack.c.b16 %v341, %v340
        %v389 = vpack.c.b16 %v343, %v342
        %v390 = vpack.c.b16 %v345, %v344
        %v391 = vpack.c.b16 %v347, %v346
        %v392 = vpack.c.b16 %v349, %v348
        %v393 = vpack.c.b16 %v351, %v350
        %v394 = vpack.c.b16 %v353, %v352
        %v395 = vpack.c.b16 %v355, %v354
        %v396 = vpack.c.b16 %v357, %v356
        %v397 = vpack.c.b16 %v359, %v358
        %v398 = vpack.c.b16 %v361, %v360
        %v399 = vpack.c.b16 %v363, %v362
        %v400 = vpack.c.b16 %v365, %v364
        %v401 = vpack.c.b16 %v367, %v366
        %v402 = vpack.c.b16 %v369, %v368
        %v403 = vpack.c.b16 %v371, %v370
        %v404 = vpack.c.b16 %v373, %v372
        %v405 = vpack.c.b16 %v375, %v374
        %v406 = vpack.c.b16 %v377, %v376
        %v407 = vpack.c.b16 %v379, %v378
        %v408 = vpack.c.b16 %v381, %v380
        %v409 = vpack.c.b16 %v383, %v382
        %v410 = vpack.c.b16 %v385, %v384
        %v411 = vpack.c.b16 %v387, %v386
        %436 = vmatprep.subr.bf16.mxu0 0
        %437 = vmatpush1.bf16.msra.mxu0 %v388
        %438 = vmatprep.subr.bf16.mxu0 0
        %439 = vmatpush1.bf16.msra.mxu0 %v389
        %440 = vmatprep.subr.bf16.mxu0 0
        %441 = vmatpush1.bf16.msra.mxu0 %v390
        %442 = vmatprep.subr.bf16.mxu0 0
        %443 = vmatpush1.bf16.msra.mxu0 %v391
        %444 = vmatprep.subr.bf16.mxu0 0
        %445 = vmatpush1.bf16.msra.mxu0 %v392
        %446 = vmatprep.subr.bf16.mxu0 0
        %447 = vmatpush1.bf16.msra.mxu0 %v393
        %448 = vmatprep.subr.bf16.mxu0 0
        %449 = vmatpush1.bf16.msra.mxu0 %v394
        %450 = vmatprep.subr.bf16.mxu0 0
        %451 = vmatpush1.bf16.msra.mxu0 %v395
        %452 = vmatprep.subr.bf16.mxu0 0
        %453 = vmatpush1.bf16.msra.mxu0 %v396
        %454 = vmatprep.subr.bf16.mxu0 0
        %455 = vmatpush1.bf16.msra.mxu0 %v397
        %456 = vmatprep.subr.bf16.mxu0 0
        %457 = vmatpush1.bf16.msra.mxu0 %v398
        %458 = vmatprep.subr.bf16.mxu0 0
        %459 = vmatpush1.bf16.msra.mxu0 %v399
        %460 = vmatprep.subr.bf16.mxu0 0
        %461 = vmatpush1.bf16.msra.mxu0 %v400
        %462 = vmatprep.subr.bf16.mxu0 0
        %463 = vmatpush1.bf16.msra.mxu0 %v401
        %464 = vmatprep.subr.bf16.mxu0 0
        %465 = vmatpush1.bf16.msra.mxu0 %v402
        %466 = vmatprep.subr.bf16.mxu0 0
        %467 = vmatpush1.bf16.msra.mxu0 %v403
        %468 = vmatprep.mubr.bf16.mxu0 %v235
        %469 = vmatmul.mubr.bf16.gmra.mrb[0].mxu0 %v234
        %v470 = vpop.f32.mrb[0].mxu0
        %v471 = vadd.f32 %v290, %v470
        %v472 = vpop.f32.mrb[0].mxu0
        %v473 = vpop.f32.mrb[0].mxu0
        %v474 = vadd.f32 %v290, %v473
        %v475 = vpop.f32.mrb[0].mxu0
        %476 = vdwg.mxu0
        %477 = vmatprep.subr.bf16.mxu0 0
        %478 = vmatpush1.bf16.msra.mxu0 %v404
        %479 = vmatprep.subr.bf16.mxu0 0
        %480 = vmatpush1.bf16.msra.mxu0 %v405
        %481 = vmatprep.subr.bf16.mxu0 0
        %482 = vmatpush1.bf16.msra.mxu0 %v406
        %483 = vmatprep.subr.bf16.mxu0 0
        %484 = vmatpush1.bf16.msra.mxu0 %v407
        %485 = vmatprep.subr.bf16.mxu0 0
        %486 = vmatpush1.bf16.msra.mxu0 %v408
        %487 = vmatprep.subr.bf16.mxu0 0
        %488 = vmatpush1.bf16.msra.mxu0 %v409
        %489 = vmatprep.subr.bf16.mxu0 0
        %490 = vmatpush1.bf16.msra.mxu0 %v410
        %491 = vmatprep.subr.bf16.mxu0 0
        %492 = vmatpush1.bf16.msra.mxu0 %v411
        %493 = vmatprep.subr.bf16.mxu0 0
        %494 = vmatpush1.bf16.msra.mxu0 0
        %495 = vmatprep.subr.bf16.mxu0 0
        %496 = vmatpush1.bf16.msra.mxu0 0
        %497 = vmatprep.subr.bf16.mxu0 0
        %498 = vmatpush1.bf16.msra.mxu0 0
        %499 = vmatprep.subr.bf16.mxu0 0
        %500 = vmatpush1.bf16.msra.mxu0 0
        %501 = vmatprep.subr.bf16.mxu0 0
        %502 = vmatpush1.bf16.msra.mxu0 0
        %503 = vmatprep.subr.bf16.mxu0 0
        %504 = vmatpush1.bf16.msra.mxu0 0
        %505 = vmatprep.subr.bf16.mxu0 0
        %506 = vmatpush1.bf16.msra.mxu0 0
        %507 = vmatprep.subr.bf16.mxu0 0
        %508 = vmatpush1.bf16.msra.mxu0 0
        %509 = vmatprep.mubr.bf16.mxu0 0
        %510 = vmatmul.mubr.bf16.gmra.mrb[0].mxu0 %v236
        %v511 = vpop.f32.mrb[0].mxu0
        %v512 = vadd.f32 %v471, %v511
        %v513 = vpop.f32.mrb[0].mxu0
        %v514 = vpop.f32.mrb[0].mxu0
        %v515 = vadd.f32 %v474, %v514
        %v516 = vpop.f32.mrb[0].mxu0
        %517 = vdwg.mxu0
        %v518 = vpack.c.bf16 %v515, %v512
        %v520 = vunpack.c.l.b16 %v518
        %v521 = vunpack.c.h.b16 %v518
        %v522 = vpack.c.b16 %v520, %v520
        %v523 = vpack.c.b16 %v521, %v521
        %526 = vst [vmem:[%s166] sm:$0xf] %v522
        %527 = vst [vmem:[%s166 + $0x4] sm:$0xf] %v523
        %s528 = sand.u32 %s93, 1
        %s529 = scalar_lea.sflag [#allocation3], %s528
        %s530 = sand.u32 %s93, 1
        %s531 = smul.addr %s530, 8
        %s532 = scalar_lea.vmem [#allocation2], %s531
        // Predicated region
        $region33: #{sspt_forward.1} parent=31 // pred_check
          %p533 = pneg %p103
        $region34: #{sspt_forward.1} parent=31 // pred_check_branch
          %535 = sbr.rel (%p533) target = $region36
        $region35: #{sspt_forward.1} parent=31 // pred_region
          %s536 = smul.u32 2, %s17
          %s538 = ssub.s32 128, 128
          %539 = vsyncadd %s529, %s538
          %s540 = smul.addr %s536, 64
          %s541 = scalar_lea.hbm %s3, %s540
          %s542 = sshll.u32 %s532, 4
          %s543 = int_to_ptr.vmem [resolvable:$true] %s542
          %548 = dma.vmem_to_hbm [thread:$0]  %s543, 128, %s541, %s529, 64, 64, 4
        $region36: #{sspt_forward.1} parent=31 // pred_fallthru
          _
      $region32: #{sspt_forward.1} parent=5 // pred_fallthru
        _
      %p549 = scmp.le.s32.totalorder 2, %s12
      // Predicated region
      $region37: #{sspt_forward.1} parent=5 // pred_check
        %p550 = pneg %p549
      $region38: #{sspt_forward.1} parent=5 // pred_check_branch
        %552 = sbr.rel (%p550) target = $region40
      $region39: #{sspt_forward.1} parent=5 // pred_region
        %s553 = ssub.s32 %s12, 2
        // Predicated region
        $region41: #{sspt_forward.1} parent=39 // pred_check
          %p554 = pneg %p109
        $region42: #{sspt_forward.1} parent=39 // pred_check_branch
          %556 = sbr.rel (%p554) target = $region44
        $region43: #{sspt_forward.1} parent=39 // pred_region
          %s557 = sand.u32 %s94, 1
          %s558 = scalar_lea.sflag [#allocation3], %s557
          %s559 = sand.u32 %s94, 1
          %s560 = smul.addr %s559, 8
          %s561 = scalar_lea.vmem [#allocation2], %s560
          %562 = dma.done %s558, 128
        $region44: #{sspt_forward.1} parent=39 // pred_fallthru
          _
      $region40: #{sspt_forward.1} parent=5 // pred_fallthru
        _
    $region6: #{sspt_forward.1} parent=1 // loop_footer
      %s16 = sadd.s32 1, %s12
    $region7: #{sspt_forward.1} parent=1 // loop_footer_branch
      %11 = sbr.rel target = $region3
    $region8: #{sspt_forward.1} parent=1 // loop_exit
      _
    %563 = vsyncpa [#allocation3], 1
    %s564 = scalar_lea.sflag [#allocation3], 1
    %565 = vsyncpa %s564, 1

</llo_original>
